<compile_context>
chip_gen: v7x
topology: tpu7x:2x2x1
jax: 0.10.0
libtpu: 0.0.40
codegen_flags: <defaults>
</compile_context>

<pallas_src>
import math
import functools

import jax
import jax.numpy as jnp
from jax.experimental import pallas as pl
from jax.experimental.pallas import tpu as pltpu


# ----------------------------------------------------------------------------
# Buffer setup (deterministic, mirrors nn.Module.__init__)
# ----------------------------------------------------------------------------
def make_pe_table(seq_len: int, d_model: int) -> jnp.ndarray:
    """Sinusoidal positional-encoding buffer, shape (max_len, 1, d_model)."""
    max_len = max(5000, seq_len)
    position = jnp.arange(0, max_len, dtype=jnp.float32)[:, None]          # (max_len, 1)
    div_term = jnp.exp(
        jnp.arange(0, d_model, 2, dtype=jnp.float32) * (-math.log(10000.0) / d_model)
    )                                                                       # (ceil(d/2),)
    angles = position * div_term                                            # (max_len, ceil(d/2))
    pe = jnp.zeros((max_len, d_model), dtype=jnp.float32)
    pe = pe.at[:, 0::2].set(jnp.sin(angles))
    if d_model % 2 == 0:
        pe = pe.at[:, 1::2].set(jnp.cos(angles))
    else:
        pe = pe.at[:, 1::2].set(jnp.cos(angles)[:, :-1])
    return pe[:, None, :]                                                   # (max_len, 1, d_model)


# ----------------------------------------------------------------------------
# Pallas kernel: out = dropout(x + pe)
# ----------------------------------------------------------------------------
def _pe_dropout_kernel(seed_ref, x_ref, pe_ref, o_ref, *,
                       p, batch, apply_dropout, use_hw_prng):
    # x_ref : (TS, B*D)   pe_ref : (TS, D)   o_ref : (TS, B*D)
    pe_bcast = jnp.tile(pe_ref[...], (1, batch))        # (TS, B*D), matches b*D + d layout
    y = x_ref[...] + pe_bcast

    if apply_dropout:
        ts, bd = y.shape
        # keep with probability (1 - p): raw-u32 threshold compare, no u32->f32 convert
        threshold = jnp.uint32(min(int(round(p * (2.0 ** 32))), 2 ** 32 - 1))
        if use_hw_prng:
            # Hardware PRNG: off the VALU slot, essentially free in a mem-bound kernel.
            pltpu.prng_seed(seed_ref[0], pl.program_id(0))
            bits = pltpu.bitcast(pltpu.prng_random_bits((ts, bd)), jnp.uint32)
        else:
            # Stateless 2-round integer-hash fallback (lowers everywhere).
            row = jax.lax.broadcasted_iota(jnp.uint32, (ts, bd), 0)
            col = jax.lax.broadcasted_iota(jnp.uint32, (ts, bd), 1)
            tile_base = pl.program_id(0).astype(jnp.uint32) * jnp.uint32(ts * bd)  # scalar unit
            if bd & (bd - 1) == 0:                                # shift instead of vmul
                gid = tile_base + (row << jnp.uint32(bd.bit_length() - 1)) + col
            else:
                gid = tile_base + row * jnp.uint32(bd) + col
            seed_mix = seed_ref[0].astype(jnp.uint32) * jnp.uint32(0x9E3779B9)      # scalar
            h = gid ^ seed_mix
            h = (h ^ (h >> jnp.uint32(15))) * jnp.uint32(0x2C1B3C6D)
            h = (h ^ (h >> jnp.uint32(12))) * jnp.uint32(0x297A2D39)
            bits = h ^ (h >> jnp.uint32(15))
        keep = bits >= threshold
        scale = jnp.float32(1.0 / (1.0 - p))
        y = y * jnp.where(keep, scale, jnp.float32(0.0)).astype(y.dtype)

    o_ref[...] = y.astype(o_ref.dtype)


# ----------------------------------------------------------------------------
# Tiling / VMEM budget
# ----------------------------------------------------------------------------
def _vmem_budget():
    """(x-block target bytes, vmem_limit_bytes) tuned to this chip's VMEM size."""
    try:
        vmem_cap = pltpu.get_tpu_info().vmem_capacity_bytes
    except Exception:
        vmem_cap = 64 << 20                       # be conservative if query unavailable
    if vmem_cap <= (64 << 20):                    # v7x: 64 MiB physical VMEM
        return 4 << 20, 40 << 20
    return 8 << 20, 64 << 20                      # v5e / v6e: 128 MiB physical VMEM


def _choose_tile(seq_len: int, row_bytes: int, target_bytes: int,
                 min_bytes: int = 1 << 20) -> int:
    """Rows per tile (multiple of 8 unless it covers the whole sequence).

    Per-step VMEM ~= 7x an x-block (2x x + 2x out + pe_bcast + dropout temps),
    which the target/limit pair from _vmem_budget keeps within the scoped limit.
    Prefers >= 8 grid steps (v7x 2-TC sharding / DMA overlap) while keeping
    tiles above `min_bytes` so per-step overhead (~0.35 us) stays negligible.
    """
    rows = max(8, (max(1, target_bytes // max(row_bytes, 1)) // 8) * 8)
    if rows >= seq_len:
        return seq_len
    while rows > 8 and pl.cdiv(seq_len, rows) < 8 and (rows // 2) * row_bytes >= min_bytes:
        rows = max(8, ((rows // 2) // 8) * 8)
    return min(rows, seq_len)


# ----------------------------------------------------------------------------
# Wrapper
# ----------------------------------------------------------------------------
_HW_PRNG_OK = [None]   # cache: does pltpu.prng_* lower/run in this environment?


def positional_encoding_forward(x, pe, *, p=0.1, training=False, seed=0):
    """x: (S, B, D); pe: (max_len, 1, D).  Returns dropout(x + pe[:S], p) in x.dtype."""
    S, B, D = x.shape
    BD = B * D
    max_len = pe.shape[0]
    apply_dropout = bool(training and p > 0.0)
    if apply_dropout and not (0.0 <= p < 1.0):
        raise ValueError(f"dropout p must be in [0, 1), got {p}")

    # Lane-dense 2D views.  pe in x.dtype so the streaming add / pe DMA stay in
    # the activation dtype.  Best perf when B*D % 128 == 0 (unmasked stores);
    # other widths are correct but fall back to masked partial stores.
    x2 = x.reshape(S, BD)
    pe2 = pe.reshape(max_len, D).astype(x.dtype)

    target_bytes, vmem_limit = _vmem_budget()
    TS = _choose_tile(S, BD * x.dtype.itemsize, target_bytes)
    if TS % 8 != 0:
        # Single full-sequence block with S not a sublane multiple: make the pe
        # block equal its full array dims so the (8, 128) rule is satisfied.
        pe2 = pe2[:S]
    grid = (pl.cdiv(S, TS),)

    seed_arr = jnp.asarray([seed], dtype=jnp.int32)
    cost = pl.CostEstimate(
        flops=2 * S * BD,
        transcendentals=0,
        bytes_accessed=2 * S * BD * x.dtype.itemsize + S * D * pe2.dtype.itemsize,
    )

    def build(use_hw_prng):
        kernel = functools.partial(
            _pe_dropout_kernel, p=float(p), batch=B,
            apply_dropout=apply_dropout, use_hw_prng=use_hw_prng)
        return pl.pallas_call(
            kernel,
            out_shape=jax.ShapeDtypeStruct((S, BD), x.dtype),
            grid_spec=pltpu.PrefetchScalarGridSpec(
                num_scalar_prefetch=1,
                grid=grid,
                in_specs=[
                    pl.BlockSpec((TS, BD), lambda i, _s: (i, 0)),
                    pl.BlockSpec((TS, D), lambda i, _s: (i, 0)),
                ],
                out_specs=pl.BlockSpec((TS, BD), lambda i, _s: (i, 0)),
            ),
            compiler_params=pltpu.CompilerParams(
                dimension_semantics=("parallel",),   # independent tiles; v7x 2-TC friendly
                vmem_limit_bytes=vmem_limit,
            ),
            cost_estimate=cost,
        )

    if not apply_dropout:
        out2 = build(False)(seed_arr, x2, pe2)
    else:
        if _HW_PRNG_OK[0] is None:
            try:
                out2 = jax.block_until_ready(build(True)(seed_arr, x2, pe2))
                _HW_PRNG_OK[0] = True
            except Exception:
                _HW_PRNG_OK[0] = False           # interpreter / HW PRNG unavailable
                out2 = build(False)(seed_arr, x2, pe2)
        else:
            out2 = build(bool(_HW_PRNG_OK[0]))(seed_arr, x2, pe2)

    return out2.reshape(S, B, D)


# ----------------------------------------------------------------------------
# Demo
# ----------------------------------------------------------------------------
if __name__ == "__main__":
    # B*D = 2*64 = 128 -> lane-dense output, unmasked vector stores.
    seq_len, batch, d_model = 8, 2, 64
    key = jax.random.PRNGKey(0)
    x = jax.random.normal(key, (seq_len, batch, d_model), dtype=jnp.float32)

    pe = make_pe_table(seq_len, d_model)
    ref = x + pe[:seq_len]

    # Eval mode (dropout is identity) — deterministic, check against pure JAX.
    out_eval = jax.block_until_ready(
        positional_encoding_forward(x, pe, p=0.1, training=False))
    assert out_eval.shape == x.shape
    assert jnp.allclose(out_eval, ref, atol=1e-6), "eval-mode mismatch"

    # Training mode — dropout mask drawn in-kernel (HW PRNG, hash fallback).
    p = 0.1
    out_train = jax.block_until_ready(
        positional_encoding_forward(x, pe, p=p, training=True, seed=0))
    assert out_train.shape == x.shape
    # Every surviving element must equal ref / (1 - p); dropped elements are 0.
    kept = out_train != 0.0
    scale = 1.0 / (1.0 - p)
    assert jnp.allclose(
        jnp.where(kept, out_train, 0.0),
        jnp.where(kept, ref * scale, 0.0),
        atol=1e-5,
    ), "training-mode kept values mismatch"

    print("KERNEL_OK")
</pallas_src>

<mosaic_0001>
module attributes {stable_mosaic.version = 11 : i64} {
  func.func @_pe_dropout_kernel(%arg0: i32, %arg1: memref<1xi32, #tpu.memory_space<smem>>, %arg2: memref<8x128xf32, #tpu.memory_space<vmem>>, %arg3: memref<8x64xf32, #tpu.memory_space<vmem>>, %arg4: memref<8x128xf32, #tpu.memory_space<vmem>>) attributes {dimension_semantics = [#tpu.dimension_semantics<parallel>], iteration_bounds = array<i64: 1>, scalar_prefetch = 1 : i64, scratch_operands = 0 : i64, tpu.core_type = #tpu.core_type<tc>, window_params = [{transform_indices = @transform_0, window_bounds = array<i64: 8, 128>}, {transform_indices = @transform_1, window_bounds = array<i64: 8, 64>}, {transform_indices = @transform_2, window_bounds = array<i64: 8, 128>}]} {
    %c0 = arith.constant 0 : index
    %c0_0 = arith.constant 0 : index
    %0 = vector.load %arg3[%c0, %c0_0] : memref<8x64xf32, #tpu.memory_space<vmem>>, vector<8x64xf32>
    %1 = tpu.concatenate %0, %0 in 1 : vector<8x64xf32>, vector<8x64xf32> -> vector<8x128xf32>
    %c0_1 = arith.constant 0 : index
    %c0_2 = arith.constant 0 : index
    %2 = vector.load %arg2[%c0_1, %c0_2] : memref<8x128xf32, #tpu.memory_space<vmem>>, vector<8x128xf32>
    %3 = arith.addf %2, %1 : vector<8x128xf32>
    %c0_3 = arith.constant 0 : index
    %c0_4 = arith.constant 0 : index
    %4 = vector.load %arg4[%c0_3, %c0_4] : memref<8x128xf32, #tpu.memory_space<vmem>>, vector<8x128xf32>
    tpu.vector_store %arg4[%c0_3, %c0_4], %3 {strides = array<i32>} : memref<8x128xf32, #tpu.memory_space<vmem>>, vector<8x128xf32>,
    return
  }
  func.func @transform_0(%arg0: i32, %arg1: memref<1xi32, #tpu.memory_space<smem>>) -> (i32, i32) {
    %c0_i32 = arith.constant 0 : i32
    %c0_i32_0 = arith.constant 0 : i32
    return %arg0, %c0_i32 : i32, i32
  }
  func.func @transform_1(%arg0: i32, %arg1: memref<1xi32, #tpu.memory_space<smem>>) -> (i32, i32) {
    %c0_i32 = arith.constant 0 : i32
    %c0_i32_0 = arith.constant 0 : i32
    return %arg0, %c0_i32 : i32, i32
  }
  func.func @transform_2(%arg0: i32, %arg1: memref<1xi32, #tpu.memory_space<smem>>) -> (i32, i32) {
    %c0_i32 = arith.constant 0 : i32
    %c0_i32_0 = arith.constant 0 : i32
    return %arg0, %c0_i32 : i32, i32
  }
}

</mosaic_0001>

<llo_original>
// kernel: tpu_custom_call.1
$region0: #{tpu_custom_call.1}
  #allocation0 [shape = 'u32[]', space=smem, size = 0x4, offset = 0x4, fixed_abs, tag = 'smem constant byte address 0x4 - core index']
  #allocation1 [shape = 'u32[144,128]{1,0:T(1,128)}', space=vmem, size = 0x12000, scoped, tag = 'internal scratch']
  #allocation2 [shape = 's32[1]{0}', space=sflag, size = 0x4, scoped, tag = 'scoped memory for tpu_custom_call.1']
  #allocation3 [shape = 's32[1]{0:T(128)S(6)}', space=smem, size = 0x200, scoped, tag = 'prefetched SMEM operand 0']
  %s0 = inlined_call_operand.<no memory space> [shape: s32[1], index: 0, kind: input, shape index: {}]
  %s1 = inlined_call_operand.vmem [shape: f32[8,128], index: 1, kind: input, shape index: {}]
  %s2 = inlined_call_operand.vmem [shape: f32[5000,64], index: 2, kind: input, shape index: {}]
  %s3 = inlined_call_operand.hbm [shape: f32[8,128], index: 3, kind: output, shape index: {}]
  %s4 = sld [smem:[#allocation0]]
  $region18: #{tpu_custom_call.1} parent=0
    _
  %s6 = ssub.s32 1, %s4
  %s7 = scalar_select 0, %s6, %s4
  %8 = sst [smem:[#allocation3]] %s0
  $region1: #{tpu_custom_call.1} parent=0
    #allocation4 [shape = 'u8[4096]{0}', space=vmem, size = 0x1000, scoped, tag = 'output window, operand 0, single buffered']
    #allocation5 [shape = 's32[1]{0}', space=sflag, size = 0x4, scoped, tag = 'scoped memory for tpu_custom_call.1']
    %9 = vsyncpa [#allocation5], 0
    // Predicated region
    $region2: #{tpu_custom_call.1} parent=1 // pred_check
      _
    $region3: #{tpu_custom_call.1} parent=1 // pred_check_branch
      %11 = sbr.rel (0) target = $region5
    $region4: #{tpu_custom_call.1} parent=1 // pred_region
      _
    $region5: #{tpu_custom_call.1} parent=1 // pred_fallthru
      _
    // Predicated region
    $region6: #{tpu_custom_call.1} parent=1 // pred_check
      _
    $region7: #{tpu_custom_call.1} parent=1 // pred_check_branch
      %13 = sbr.rel (0) target = $region9
    $region8: #{tpu_custom_call.1} parent=1 // pred_region
      _
    $region9: #{tpu_custom_call.1} parent=1 // pred_fallthru
      _
    %v14 = vld [vmem:[%s2] sm:$0xff]
    %16 = vrot.lane.b32.xlu0 %v14, 64
    %v17 = vpop.permute.xlu0 %16
    %vm19 = vcmask 523264
    %v20 = vsel %vm19, %v14, %v17
    %v21 = vld [vmem:[%s1] sm:$0xff]
    %v22 = vadd.f32 %v21, %v20
    %23 = vst [vmem:[#allocation4] sm:$0xff] %v22
    // Predicated region
    $region10: #{tpu_custom_call.1} parent=1 // pred_check
      _
    $region11: #{tpu_custom_call.1} parent=1 // pred_check_branch
      %25 = sbr.rel (0) target = $region13
    $region12: #{tpu_custom_call.1} parent=1 // pred_region
      %s27 = ssub.s32 128, 128
      %28 = vsyncadd [#allocation5], %s27
      %s30 = sshll.u32 [#allocation4], 4
      %s31 = int_to_ptr.vmem [resolvable:$true] %s30
      %33 = dma.vmem_to_hbm [thread:$0]  %s31, 128, %s3, [#allocation5]
    $region13: #{tpu_custom_call.1} parent=1 // pred_fallthru
      _
    // Predicated region
    $region14: #{tpu_custom_call.1} parent=1 // pred_check
      _
    $region15: #{tpu_custom_call.1} parent=1 // pred_check_branch
      %35 = sbr.rel (0) target = $region17
    $region16: #{tpu_custom_call.1} parent=1 // pred_region
      %36 = dma.done [#allocation5], 128
    $region17: #{tpu_custom_call.1} parent=1 // pred_fallthru
      _
    %37 = vsyncpa [#allocation5], 1

</llo_original>
